<compile_context>
chip_gen: v7x
topology: tpu7x:2x2x1
jax: 0.10.0
libtpu: 0.0.40
codegen_flags: <defaults>
</compile_context>

<pallas_src>
import jax
import jax.numpy as jnp
from jax.experimental import pallas as pl
from jax.experimental.pallas import tpu as pltpu

HIDDEN_DIM = 8

_LANE = 128
_SUBLANE = 8
_TARGET_BLOCK_BYTES = 2 << 20  # ~2 MiB output blocks (double-buffered << VMEM limit)


def get_semantic_type_dims(semantic_type):
    semantic_type_str = str(semantic_type)
    semantic_type_dims_dict = {
        'e': (-1, 1, HIDDEN_DIM),
        't': (-1, 1),
        '<e,t>': (-1, HIDDEN_DIM, 1),
        '<<e,t>,e>': (-1, HIDDEN_DIM, HIDDEN_DIM),
        '<e,<e,t>>': (-1, HIDDEN_DIM, HIDDEN_DIM),
        '<<e,t>,<e,t>>': (-1, HIDDEN_DIM, HIDDEN_DIM),
    }
    return semantic_type_dims_dict[semantic_type_str]


def _broadcast_cat_kernel(ext_ref, out_ref):
    # ext_ref: (1, TF)  slice of the concatenated/flattened extensions
    # out_ref: (TB, TF) lane-dense output block
    out_ref[...] = jnp.broadcast_to(ext_ref[...], out_ref.shape)


def _choose_tiles(batch, f, itemsize):
    """Pick (TB, TF) output block dims: big (~2 MiB), (8,128)-legal blocks."""
    # Lane tile: keep the full F row unless it is huge AND a multiple of 128
    # can tile it; otherwise full-dim blocks are always legal.
    if f * itemsize <= _TARGET_BLOCK_BYTES or f % _LANE != 0:
        tf = f
    else:
        tf = min(f, _TARGET_BLOCK_BYTES // itemsize)
        tf -= tf % _LANE
        tf = max(tf, _LANE)
    # Batch tile: as many rows as fit the byte target, multiple of 8 (or full batch).
    rows = max(1, _TARGET_BLOCK_BYTES // (tf * itemsize))
    if rows >= batch:
        tb = batch                       # full batch dim -> always a legal block
    else:
        tb = max(_SUBLANE, (rows // _SUBLANE) * _SUBLANE)
        tb = min(tb, batch)
    return tb, tf


def proposition_set_forward(state, ext_flat):
    """Broadcast the (1, F) concatenated extension row to (B, F) via Pallas."""
    batch = state.shape[0]
    f = int(ext_flat.shape[-1])
    itemsize = jnp.dtype(ext_flat.dtype).itemsize

    tb, tf = _choose_tiles(batch, f, itemsize)
    grid = (pl.cdiv(batch, tb), pl.cdiv(f, tf))

    return pl.pallas_call(
        _broadcast_cat_kernel,
        out_shape=jax.ShapeDtypeStruct((batch, f), ext_flat.dtype),
        grid_spec=pltpu.PrefetchScalarGridSpec(
            num_scalar_prefetch=0,
            grid=grid,
            in_specs=[
                # tiny constant row; only its lane slice changes per F-tile
                pl.BlockSpec((1, tf), lambda b, fi: (0, fi)),
            ],
            out_specs=pl.BlockSpec((tb, tf), lambda b, fi: (b, fi)),
        ),
        compiler_params=pltpu.CompilerParams(
            # independent output blocks -> both axes sharded across TCs on v7x
            dimension_semantics=("parallel", "parallel"),
        ),
    )(ext_flat)


class FixedExtensionModuleJAX:
    """JAX mirror of FixedExtensionModule (constant extension, deterministic init)."""

    def __init__(self, name, output_dims=None, semantic_type=None, key=None):
        self.name = name
        self.semantic_type = semantic_type
        if semantic_type is not None:
            output_dims = get_semantic_type_dims(semantic_type)
        self.output_dims = output_dims
        shape = tuple(abs(x) for x in output_dims)
        if key is None:
            key = jax.random.PRNGKey(0)
        # torch Uniform(-1, 1).sample(shape) analogue, deterministic seed
        self.extension = jax.random.uniform(
            key, shape, dtype=jnp.float32, minval=-1.0, maxval=1.0
        )

    def __call__(self, state):
        # Plain-JAX per-proposition forward (reference check only; the set
        # module fuses all props into a single Pallas call).
        batch = state.shape[0]
        return jnp.broadcast_to(self.extension, (batch,) + self.extension.shape[1:])


class PropositionSetModuleJAX:
    """JAX/Pallas mirror of PropositionSetModule.

    forward(state) == torch.cat([prop.forward(state) for prop in props], dim=1)

    All proposition forwards + the concat are fused into ONE Pallas broadcast:
    the constant extensions are flattened and concatenated once at init into a
    lane-dense (1, F) row; the kernel writes coarse (TB, TF) output blocks; the
    wrapper reshapes back to (B, sum_i D1_i, D2).
    """

    def __init__(self, semantic_intensions):
        # TODO(synk): nn.Module.add_module dynamic registration is pure Python
        # bookkeeping; propositions are kept as a plain list here.
        self.semantic_intensions = list(semantic_intensions)
        if not self.semantic_intensions:
            raise ValueError("need at least one proposition")

        exts = [p.extension for p in self.semantic_intensions]
        tail = exts[0].shape[2:]
        dtype = exts[0].dtype
        for e in exts:
            if e.shape[0] != 1 or e.shape[2:] != tail or e.dtype != dtype:
                raise ValueError(
                    "propositions must agree on all dims except dim=1 (torch.cat rule)"
                )

        self._total_d1 = sum(int(e.shape[1]) for e in exts)
        self._tail = tuple(int(d) for d in tail)
        # Row-major flatten of cat(dim=1) == concatenation of each prop's
        # flattened (D1_i * D2) block, so this (1, F) row reproduces the concat.
        self._ext_flat = jnp.concatenate([e.reshape(1, -1) for e in exts], axis=-1)

    def __call__(self, state):
        batch = state.shape[0]
        out_flat = proposition_set_forward(state, self._ext_flat)
        return out_flat.reshape((batch, self._total_d1) + self._tail)


if __name__ == "__main__":
    key = jax.random.PRNGKey(0)
    k_state, k_red, k_blue = jax.random.split(key, 3)

    # Small example: batch=2 NCHW state (only the batch dim is consumed).
    state = jax.random.normal(k_state, (2, 3, 16, 16), dtype=jnp.float32)

    props = [
        FixedExtensionModuleJAX("red", semantic_type='<e,<e,t>>', key=k_red),
        FixedExtensionModuleJAX("blue", semantic_type='<e,<e,t>>', key=k_blue),
    ]
    module = PropositionSetModuleJAX(props)

    out = module(state)
    out = jax.block_until_ready(out)

    # Reference: plain-JAX per-prop broadcast + concat along dim=1
    ref = jnp.concatenate([p(state) for p in props], axis=1)

    assert out.shape == (2, 2 * HIDDEN_DIM, HIDDEN_DIM), out.shape
    assert out.dtype == jnp.float32
    assert bool(jnp.allclose(out, ref))

    print("KERNEL_OK")
</pallas_src>

<mosaic_0001>
module attributes {stable_mosaic.version = 11 : i64} {
  func.func @_broadcast_cat_kernel(%arg0: i32, %arg1: i32, %arg2: memref<1x128xf32, #tpu.memory_space<vmem>>, %arg3: memref<2x128xf32, #tpu.memory_space<vmem>>) attributes {dimension_semantics = [#tpu.dimension_semantics<parallel>, #tpu.dimension_semantics<parallel>], iteration_bounds = array<i64: 1, 1>, scalar_prefetch = 0 : i64, scratch_operands = 0 : i64, tpu.core_type = #tpu.core_type<tc>, window_params = [{transform_indices = @transform_0, window_bounds = array<i64: 1, 128>}, {transform_indices = @transform_1, window_bounds = array<i64: 2, 128>}]} {
    %c0 = arith.constant 0 : index
    %c0_0 = arith.constant 0 : index
    %0 = vector.load %arg2[%c0, %c0_0] : memref<1x128xf32, #tpu.memory_space<vmem>>, vector<1x128xf32>
    %1 = vector.shape_cast %0 : vector<1x128xf32> to vector<1x128xf32>
    %2 = vector.broadcast %1 : vector<1x128xf32> to vector<2x128xf32>
    %c0_1 = arith.constant 0 : index
    %c0_2 = arith.constant 0 : index
    %3 = vector.load %arg3[%c0_1, %c0_2] : memref<2x128xf32, #tpu.memory_space<vmem>>, vector<2x128xf32>
    tpu.vector_store %arg3[%c0_1, %c0_2], %2 {strides = array<i32>} : memref<2x128xf32, #tpu.memory_space<vmem>>, vector<2x128xf32>,
    return
  }
  func.func @transform_0(%arg0: i32, %arg1: i32) -> (i32, i32) {
    %c0_i32 = arith.constant 0 : i32
    %c0_i32_0 = arith.constant 0 : i32
    return %c0_i32, %arg1 : i32, i32
  }
  func.func @transform_1(%arg0: i32, %arg1: i32) -> (i32, i32) {
    %c0_i32 = arith.constant 0 : i32
    return %arg0, %arg1 : i32, i32
  }
}

</mosaic_0001>

<llo_original>
// kernel: tpu_custom_call.1
$region0: #{tpu_custom_call.1}
  #allocation0 [shape = 'u32[]', space=smem, size = 0x4, offset = 0x4, fixed_abs, tag = 'smem constant byte address 0x4 - core index']
  #allocation1 [shape = 'u32[144,128]{1,0:T(1,128)}', space=vmem, size = 0x12000, scoped, tag = 'internal scratch']
  %s0 = inlined_call_operand.hbm [shape: f32[1,128], index: 0, kind: input, shape index: {}]
  %s1 = inlined_call_operand.hbm [shape: f32[2,128], index: 1, kind: output, shape index: {}]
  %s2 = sld [smem:[#allocation0]]
  $region18: #{tpu_custom_call.1} parent=0
    _
  %s4 = ssub.s32 1, %s2
  %s5 = scalar_select 0, %s4, %s2
  $region1: #{tpu_custom_call.1} parent=0
    #allocation2 [shape = 'u8[512]{0}', space=vmem, size = 0x400, scoped, tag = 'input window, operand 0, single buffered']
    #allocation3 [shape = 's32[1]{0}', space=sflag, size = 0x4, scoped, tag = 'scoped memory for tpu_custom_call.1']
    #allocation4 [shape = 's32[1]{0}', space=sflag, size = 0x4, scoped, tag = 'scoped memory for tpu_custom_call.1']
    #allocation5 [shape = 'u8[1024]{0}', space=vmem, size = 0x400, scoped, tag = 'output window, operand 0, single buffered']
    %6 = vsyncpa [#allocation3], 0
    %7 = vsyncpa [#allocation4], 0
    // Predicated region
    $region2: #{tpu_custom_call.1} parent=1 // pred_check
      _
    $region3: #{tpu_custom_call.1} parent=1 // pred_check_branch
      %9 = sbr.rel (0) target = $region5
    $region4: #{tpu_custom_call.1} parent=1 // pred_region
      %s11 = ssub.s32 16, 16
      %12 = vsyncadd [#allocation3], %s11
      %s14 = sshll.u32 [#allocation2], 4
      %s15 = int_to_ptr.vmem [resolvable:$true] %s14
      %17 = dma.hbm_to_vmem [thread:$0]  %s0, 16, %s15, [#allocation3]
    $region5: #{tpu_custom_call.1} parent=1 // pred_fallthru
      _
    // Predicated region
    $region6: #{tpu_custom_call.1} parent=1 // pred_check
      _
    $region7: #{tpu_custom_call.1} parent=1 // pred_check_branch
      %19 = sbr.rel (0) target = $region9
    $region8: #{tpu_custom_call.1} parent=1 // pred_region
      %20 = dma.done [#allocation3], 16
    $region9: #{tpu_custom_call.1} parent=1 // pred_fallthru
      _
    %v21 = vld [vmem:[#allocation2] sm:$0x1]
    %v23 = vlaneseq
    %v24 = vshrl.u32 %v23, 7
    %v25 = vsub.s32 0, %v24
    %v26 = vrot.slane %v21, %v25
    %28 = vst [vmem:[#allocation5] sm:$0x3] %v26
    // Predicated region
    $region10: #{tpu_custom_call.1} parent=1 // pred_check
      _
    $region11: #{tpu_custom_call.1} parent=1 // pred_check_branch
      %30 = sbr.rel (0) target = $region13
    $region12: #{tpu_custom_call.1} parent=1 // pred_region
      %s32 = ssub.s32 32, 32
      %33 = vsyncadd [#allocation4], %s32
      %s35 = sshll.u32 [#allocation5], 4
      %s36 = int_to_ptr.vmem [resolvable:$true] %s35
      %38 = dma.vmem_to_hbm [thread:$0]  %s36, 32, %s1, [#allocation4]
    $region13: #{tpu_custom_call.1} parent=1 // pred_fallthru
      _
    // Predicated region
    $region14: #{tpu_custom_call.1} parent=1 // pred_check
      _
    $region15: #{tpu_custom_call.1} parent=1 // pred_check_branch
      %40 = sbr.rel (0) target = $region17
    $region16: #{tpu_custom_call.1} parent=1 // pred_region
      %41 = dma.done [#allocation4], 32
    $region17: #{tpu_custom_call.1} parent=1 // pred_fallthru
      _
    %42 = vsyncpa [#allocation3], 1
    %43 = vsyncpa [#allocation4], 1

</llo_original>
